<compile_context>
chip_gen: v7x
topology: tpu7x:2x2x1
jax: 0.10.0
libtpu: 0.0.40
codegen_flags: <defaults>
</compile_context>

<pallas_src>
import math
import numpy as np
import jax
import jax.numpy as jnp
from jax.experimental import pallas as pl
from jax.experimental.pallas import tpu as pltpu


# ---------------------------------------------------------------------------
# Config (mirrors the torch module's `config`, small shapes)
# ---------------------------------------------------------------------------
class Config:
    N_FFT = 64
    N_MELS = 16
    N_MFCC = 8
    SAMPLE_RATE = 16000


# ---------------------------------------------------------------------------
# Host-side constant construction (numpy; mirrors torchaudio defaults)
# ---------------------------------------------------------------------------
def _hann_window(n_fft):
    n = np.arange(n_fft, dtype=np.float64)
    return 0.5 - 0.5 * np.cos(2.0 * np.pi * n / n_fft)      # periodic hann


def _dft_matrices(n_fft):
    # one-sided DFT cos/sin matrices, shape (n_fft, n_freq)
    n_freq = n_fft // 2 + 1
    n = np.arange(n_fft, dtype=np.float64)[:, None]
    f = np.arange(n_freq, dtype=np.float64)[None, :]
    ang = 2.0 * np.pi * n * f / n_fft
    return np.cos(ang), np.sin(ang)


def _melscale_fbanks(n_freqs, n_mels, sample_rate):
    # torchaudio.functional.melscale_fbanks (f_min=0, f_max=sr/2, htk, norm=None)
    def hz_to_mel(f):
        return 2595.0 * np.log10(1.0 + f / 700.0)

    def mel_to_hz(m):
        return 700.0 * (10.0 ** (m / 2595.0) - 1.0)

    f_min, f_max = 0.0, float(sample_rate) / 2.0
    all_freqs = np.linspace(0.0, sample_rate // 2, n_freqs)
    m_pts = np.linspace(hz_to_mel(f_min), hz_to_mel(f_max), n_mels + 2)
    f_pts = mel_to_hz(m_pts)
    f_diff = f_pts[1:] - f_pts[:-1]
    slopes = f_pts[None, :] - all_freqs[:, None]
    down = -slopes[:, :-2] / f_diff[:-1]
    up = slopes[:, 2:] / f_diff[1:]
    return np.maximum(0.0, np.minimum(down, up))             # (n_freqs, n_mels)


def _create_dct(n_mfcc, n_mels):
    # torchaudio.functional.create_dct(..., norm='ortho') -> (n_mels, n_mfcc)
    n = np.arange(n_mels, dtype=np.float64)
    k = np.arange(n_mfcc, dtype=np.float64)[:, None]
    dct = np.cos(np.pi / n_mels * (n + 0.5) * k)             # (n_mfcc, n_mels)
    dct[0] *= 1.0 / math.sqrt(2.0)
    dct *= math.sqrt(2.0 / n_mels)
    return dct.T                                             # (n_mels, n_mfcc)


def _build_kernel_constants(config):
    n_fft, n_mels, n_mfcc, sr = (config.N_FFT, config.N_MELS,
                                 config.N_MFCC, config.SAMPLE_RATE)
    n_freq = n_fft // 2 + 1
    nfp = ((n_freq + 7) // 8) * 8        # pad so the re/im split is 8-aligned

    w = _hann_window(n_fft)                                  # (n_fft,)
    cos_m, sin_m = _dft_matrices(n_fft)                      # (n_fft, n_freq)

    # fused, window-folded, transposed DFT operator: (2*nfp, n_fft)
    wmat = np.zeros((2 * nfp, n_fft), dtype=np.float32)
    wmat[:n_freq, :] = (cos_m * w[:, None]).T
    wmat[nfp:nfp + n_freq, :] = (sin_m * w[:, None]).T

    fb = _melscale_fbanks(n_freq, n_mels, sr)                # (n_freq, n_mels)
    fbt = np.zeros((n_mels, nfp), dtype=np.float32)
    fbt[:, :n_freq] = fb.T                                   # (n_mels, nfp)

    dctt = _create_dct(n_mfcc, n_mels).T.astype(np.float32)  # (n_mfcc, n_mels)
    return jnp.asarray(wmat), jnp.asarray(fbt), jnp.asarray(dctt), nfp


# ---------------------------------------------------------------------------
# Pallas kernel: one batch block per grid step; the bb batch rows are folded
# onto a 128-padded lane (time) axis so every operator is a single batched op.
# ---------------------------------------------------------------------------
def _make_kernel(bb, T, Tp, n_fft):
    L = bb * Tp                                  # lanes per grid step

    def kernel(hv_ref, w_ref, fbt_ref, dctt_ref, out_ref):
        nfp = w_ref.shape[0] // 2
        n_mfcc = dctt_ref.shape[0]

        wmat = w_ref[...]                        # (2*nfp, n_fft) fused win*DFT
        fbt = fbt_ref[...]                       # (n_mels, nfp)
        dctt = dctt_ref[...]                     # (n_mfcc, n_mels)

        # ---- implicit 50%-overlap frames, time-major (bb*Tp, n_fft) ------
        g = hv_ref[...]                          # (bb, T1p, hop) waveform halves
        frames3 = jnp.concatenate([g[:, :T, :], g[:, 1:T + 1, :]], axis=2)
        if Tp > T:                               # pad frames to the 128-aligned Tp
            frames3 = jnp.concatenate(
                [frames3, jnp.zeros((bb, Tp - T, n_fft), jnp.float32)], axis=1)
        frames = jnp.reshape(frames3, (L, n_fft))

        # ---- windowed one-sided DFT (re & im fused): contract the n_fft
        #      (lane) axes of both operands -> time stays on the lane axis.
        #      (default Mosaic f32 matmul precision; validated vs. the f32
        #       HIGHEST-precision reference within the test tolerance)
        y = jax.lax.dot_general(
            wmat, frames, (((1,), (1,)), ((), ())),
            preferred_element_type=jnp.float32)  # (2*nfp, L)
        re = y[:nfp, :]
        im = y[nfp:, :]
        power = re * re + im * im                # (nfp, L); padded rows are 0

        # ---- mel filterbank -> dB -> DCT (all feature-major) --------------
        mel = jnp.dot(fbt, power, preferred_element_type=jnp.float32)   # (n_mels, L)
        db = 10.0 * jnp.log10(jnp.maximum(mel, 1e-10))
        mfcc = jnp.dot(dctt, db, preferred_element_type=jnp.float32)    # (n_mfcc, L)

        # ---- ComputeDeltas(win_length=4): (x[t+1]-x[t-1])/2, replicate edges.
        # Circular 1-lane shifts over the whole folded lane axis + an iota
        # edge mask per Tp-segment (jnp.roll lowers to in-register lane shifts;
        # pltpu.roll is a drop-in alternative).
        t_idx = jax.lax.broadcasted_iota(jnp.int32, (n_mfcc, Tp), 1)
        if bb > 1:
            t_idx = jnp.concatenate([t_idx] * bb, axis=1)    # (n_mfcc, L)
        prv = jnp.roll(mfcc, 1, axis=1)
        nxt = jnp.roll(mfcc, -1, axis=1)
        prv = jnp.where(t_idx == 0, mfcc, prv)               # replicate left edge
        nxt = jnp.where(t_idx >= T - 1, mfcc, nxt)           # replicate right edge
        delta = 0.5 * (nxt - prv)

        full = jnp.concatenate([mfcc, delta], axis=0)        # (2*n_mfcc, L)
        for b in range(bb):                                  # lane-dense, 128-aligned stores
            out_ref[b] = full[:, b * Tp:(b + 1) * Tp]

    return kernel


def _pick_batch_block(B, Tp):
    # ~2 KiB of VMEM-resident f32 per (batch row x padded frame), incl. the
    # double-buffered input/output blocks -> keep per-step footprint <= ~12 MiB
    # (safe under v5e's scoped default and v7x's 64 MiB physical VMEM).
    cap = max(1, (12 * 1024 * 1024) // (Tp * 2048))
    if B <= 1:
        return 1
    # Keep >= 2 "parallel" grid steps so both v7x TensorCores get work; the
    # extra step costs only ~0.35us on single-TensorCore chips (v5e/v6e).
    return max(1, min(cap, (B + 1) // 2))


def audio_features(waveform, config=Config):
    n_fft = config.N_FFT
    n_mels = config.N_MELS
    n_mfcc = config.N_MFCC
    hop = n_fft // 2
    B, L = waveform.shape
    T = 1 + L // hop
    pad = n_fft // 2
    Tp = ((T + 127) // 128) * 128            # lane-dense (128-aligned) time axis
    T1p = ((T + 1 + 7) // 8) * 8             # 8-aligned number of halves

    # torch.stft(center=True, pad_mode='reflect'); every sample stored once as
    # hop-sized "halves" in the natural contiguous (B, T+1, hop) layout (no
    # host transpose); frame t = concat(halves[t], halves[t+1]) in-kernel.
    padded = jnp.pad(waveform.astype(jnp.float32), ((0, 0), (pad, pad)),
                     mode="reflect")
    halves = padded[:, :(T + 1) * hop].reshape(B, T + 1, hop)

    wmat, fbt, dctt, nfp = _build_kernel_constants(config)

    bb = _pick_batch_block(B, Tp)
    Bp = ((B + bb - 1) // bb) * bb
    halves = jnp.pad(halves, ((0, Bp - B), (0, T1p - (T + 1)), (0, 0)))

    kernel = _make_kernel(bb, T, Tp, n_fft)

    grid_spec = pltpu.PrefetchScalarGridSpec(
        num_scalar_prefetch=0,
        grid=(Bp // bb,),
        in_specs=[
            pl.BlockSpec((bb, T1p, hop), lambda i: (i, 0, 0)),     # waveform halves
            pl.BlockSpec((2 * nfp, n_fft), lambda i: (0, 0)),      # fused window*DFT
            pl.BlockSpec((n_mels, nfp), lambda i: (0, 0)),         # mel filterbank^T
            pl.BlockSpec((n_mfcc, n_mels), lambda i: (0, 0)),      # DCT^T
        ],
        out_specs=pl.BlockSpec((bb, 2 * n_mfcc, Tp), lambda i: (i, 0, 0)),
    )

    out = pl.pallas_call(
        kernel,
        out_shape=jax.ShapeDtypeStruct((Bp, 2 * n_mfcc, Tp), jnp.float32),
        grid_spec=grid_spec,
        compiler_params=pltpu.CompilerParams(
            dimension_semantics=("parallel",),
            vmem_limit_bytes=32 * 1024 * 1024),
    )(halves, wmat, fbt, dctt)

    return out[:B, :, :T]


# ---------------------------------------------------------------------------
# Pure-JAX reference (natural formulation, independent of the kernel tricks)
# ---------------------------------------------------------------------------
def audio_features_ref(waveform, config=Config):
    n_fft, n_mels, n_mfcc, sr = (config.N_FFT, config.N_MELS,
                                 config.N_MFCC, config.SAMPLE_RATE)
    hop = n_fft // 2
    n_freq = n_fft // 2 + 1
    B, L = waveform.shape
    T = 1 + L // hop
    pad = n_fft // 2
    padded = jnp.pad(waveform.astype(jnp.float32), ((0, 0), (pad, pad)),
                     mode="reflect")
    idx = (np.arange(T) * hop)[:, None] + np.arange(n_fft)[None, :]
    frames = padded[:, idx]                                    # (B, T, n_fft)

    w = jnp.asarray(_hann_window(n_fft).astype(np.float32))
    cos_m, sin_m = _dft_matrices(n_fft)
    cos_m = jnp.asarray(cos_m.astype(np.float32))
    sin_m = jnp.asarray(sin_m.astype(np.float32))
    hi = jax.lax.Precision.HIGHEST

    xw = frames * w[None, None, :]
    re = jnp.einsum("btn,nf->btf", xw, cos_m, precision=hi)
    im = jnp.einsum("btn,nf->btf", xw, sin_m, precision=hi)
    power = re * re + im * im

    fb = jnp.asarray(_melscale_fbanks(n_freq, n_mels, sr).astype(np.float32))
    mel = jnp.einsum("btf,fm->btm", power, fb, precision=hi)
    db = 10.0 * jnp.log10(jnp.maximum(mel, 1e-10))
    dct = jnp.asarray(_create_dct(n_mfcc, n_mels).astype(np.float32))
    mfcc = jnp.einsum("btm,mk->btk", db, dct, precision=hi)    # (B, T, n_mfcc)
    mfcc = jnp.transpose(mfcc, (0, 2, 1))                      # (B, n_mfcc, T)

    nxt = jnp.concatenate([mfcc[:, :, 1:], mfcc[:, :, -1:]], axis=2)
    prv = jnp.concatenate([mfcc[:, :, :1], mfcc[:, :, :-1]], axis=2)
    delta = 0.5 * (nxt - prv)
    return jnp.concatenate([mfcc, delta], axis=1)


if __name__ == "__main__":
    key = jax.random.PRNGKey(0)
    B, L = 2, 256                                  # waveform: (batch, samples)
    waveform = jax.random.normal(key, (B, L), dtype=jnp.float32)

    out = jax.block_until_ready(audio_features(waveform))
    expected_T = 1 + L // (Config.N_FFT // 2)
    assert out.shape == (B, 2 * Config.N_MFCC, expected_T), out.shape

    ref = jax.block_until_ready(audio_features_ref(waveform))
    np.testing.assert_allclose(np.asarray(out), np.asarray(ref),
                               rtol=1e-2, atol=5e-2)
    print("KERNEL_OK")
</pallas_src>

<mosaic_0001>
module attributes {stable_mosaic.version = 11 : i64} {
  func.func @kernel(%arg0: i32, %arg1: memref<1x16x32xf32, #tpu.memory_space<vmem>>, %arg2: memref<80x64xf32, #tpu.memory_space<vmem>>, %arg3: memref<16x40xf32, #tpu.memory_space<vmem>>, %arg4: memref<8x16xf32, #tpu.memory_space<vmem>>, %arg5: memref<1x16x128xf32, #tpu.memory_space<vmem>>) attributes {dimension_semantics = [#tpu.dimension_semantics<parallel>], iteration_bounds = array<i64: 2>, scalar_prefetch = 0 : i64, scratch_operands = 0 : i64, tpu.core_type = #tpu.core_type<tc>, window_params = [{transform_indices = @transform_0, window_bounds = array<i64: 1, 16, 32>}, {pipeline_mode = #tpu.pipeline_mode<synchronous>, transform_indices = @transform_1, window_bounds = array<i64: 80, 64>}, {pipeline_mode = #tpu.pipeline_mode<synchronous>, transform_indices = @transform_2, window_bounds = array<i64: 16, 40>}, {pipeline_mode = #tpu.pipeline_mode<synchronous>, transform_indices = @transform_3, window_bounds = array<i64: 8, 16>}, {transform_indices = @transform_4, window_bounds = array<i64: 1, 16, 128>}]} {
    %c0 = arith.constant 0 : index
    %c0_0 = arith.constant 0 : index
    %0 = vector.load %arg2[%c0, %c0_0] : memref<80x64xf32, #tpu.memory_space<vmem>>, vector<80x64xf32>
    %c0_1 = arith.constant 0 : index
    %c0_2 = arith.constant 0 : index
    %1 = vector.load %arg3[%c0_1, %c0_2] : memref<16x40xf32, #tpu.memory_space<vmem>>, vector<16x40xf32>
    %c0_3 = arith.constant 0 : index
    %c0_4 = arith.constant 0 : index
    %2 = vector.load %arg4[%c0_3, %c0_4] : memref<8x16xf32, #tpu.memory_space<vmem>>, vector<8x16xf32>
    %c0_5 = arith.constant 0 : index
    %c0_6 = arith.constant 0 : index
    %c0_7 = arith.constant 0 : index
    %3 = vector.load %arg1[%c0_5, %c0_6, %c0_7] : memref<1x16x32xf32, #tpu.memory_space<vmem>>, vector<1x16x32xf32>
    %4 = vector.extract_strided_slice %3 {offsets = [0, 0, 0], sizes = [1, 9, 32], strides = [1, 1, 1]} : vector<1x16x32xf32> to vector<1x9x32xf32>
    %5 = vector.extract_strided_slice %3 {offsets = [0, 1, 0], sizes = [1, 9, 32], strides = [1, 1, 1]} : vector<1x16x32xf32> to vector<1x9x32xf32>
    %6 = tpu.concatenate %4, %5 in 2 : vector<1x9x32xf32>, vector<1x9x32xf32> -> vector<1x9x64xf32>
    %cst = arith.constant 0.000000e+00 : f32
    %7 = vector.broadcast %cst : f32 to vector<1x119x64xf32>
    %8 = tpu.concatenate %6, %7 in 1 : vector<1x9x64xf32>, vector<1x119x64xf32> -> vector<1x128x64xf32>
    %9 = vector.shape_cast %8 : vector<1x128x64xf32> to vector<128x64xf32>
    %cst_8 = arith.constant dense<0.000000e+00> : vector<80x128xf32>
    %10 = tpu.matmul %0, %9, %cst_8 {dimension_numbers = #tpu.dot_dimension_numbers<[1], [1], [0], [0], [0, 0, 1, 0], [], []>} : vector<80x64xf32>, vector<128x64xf32>, vector<80x128xf32> -> vector<80x128xf32>
    %11 = vector.extract_strided_slice %10 {offsets = [0, 0], sizes = [40, 128], strides = [1, 1]} : vector<80x128xf32> to vector<40x128xf32>
    %12 = vector.extract_strided_slice %10 {offsets = [40, 0], sizes = [40, 128], strides = [1, 1]} : vector<80x128xf32> to vector<40x128xf32>
    %13 = arith.mulf %11, %11 : vector<40x128xf32>
    %14 = arith.mulf %12, %12 : vector<40x128xf32>
    %15 = arith.addf %13, %14 : vector<40x128xf32>
    %cst_9 = arith.constant dense<0.000000e+00> : vector<16x128xf32>
    %16 = tpu.matmul %1, %15, %cst_9 {dimension_numbers = #tpu.dot_dimension_numbers<[1], [0], [0], [1], [0, 0, 1, 1], [], []>} : vector<16x40xf32>, vector<40x128xf32>, vector<16x128xf32> -> vector<16x128xf32>
    %cst_10 = arith.constant 1.000000e-10 : f32
    %17 = vector.broadcast %cst_10 : f32 to vector<16x128xf32>
    %18 = arith.maximumf %16, %17 : vector<16x128xf32>
    %19 = math.log %18 : vector<16x128xf32>
    %cst_11 = arith.constant 0.434294492 : f32
    %20 = vector.broadcast %cst_11 : f32 to vector<16x128xf32>
    %21 = arith.mulf %19, %20 : vector<16x128xf32>
    %cst_12 = arith.constant 1.000000e+01 : f32
    %22 = vector.broadcast %cst_12 : f32 to vector<16x128xf32>
    %23 = arith.mulf %22, %21 : vector<16x128xf32>
    %cst_13 = arith.constant dense<0.000000e+00> : vector<8x128xf32>
    %24 = tpu.matmul %2, %23, %cst_13 {dimension_numbers = #tpu.dot_dimension_numbers<[1], [0], [0], [1], [0, 0, 1, 1], [], []>} : vector<8x16xf32>, vector<16x128xf32>, vector<8x128xf32> -> vector<8x128xf32>
    %25 = tpu.iota {dimensions = array<i32: 1>} : vector<8x128xi32>
    %26 = vector.extract_strided_slice %24 {offsets = [0, 127], sizes = [8, 1], strides = [1, 1]} : vector<8x128xf32> to vector<8x1xf32>
    %27 = vector.extract_strided_slice %24 {offsets = [0, 0], sizes = [8, 127], strides = [1, 1]} : vector<8x128xf32> to vector<8x127xf32>
    %28 = tpu.concatenate %26, %27 in 1 : vector<8x1xf32>, vector<8x127xf32> -> vector<8x128xf32>
    %29 = vector.extract_strided_slice %24 {offsets = [0, 1], sizes = [8, 127], strides = [1, 1]} : vector<8x128xf32> to vector<8x127xf32>
    %30 = vector.extract_strided_slice %24 {offsets = [0, 0], sizes = [8, 1], strides = [1, 1]} : vector<8x128xf32> to vector<8x1xf32>
    %31 = tpu.concatenate %29, %30 in 1 : vector<8x127xf32>, vector<8x1xf32> -> vector<8x128xf32>
    %c0_i32 = arith.constant 0 : i32
    %32 = vector.broadcast %c0_i32 : i32 to vector<8x128xi32>
    %33 = arith.cmpi eq, %25, %32 : vector<8x128xi32>
    %34 = arith.select %33, %24, %28 : vector<8x128xi1>, vector<8x128xf32>
    %c8_i32 = arith.constant 8 : i32
    %35 = vector.broadcast %c8_i32 : i32 to vector<8x128xi32>
    %36 = arith.cmpi sge, %25, %35 : vector<8x128xi32>
    %37 = arith.select %36, %24, %31 : vector<8x128xi1>, vector<8x128xf32>
    %38 = arith.subf %37, %34 : vector<8x128xf32>
    %cst_14 = arith.constant 5.000000e-01 : f32
    %39 = vector.broadcast %cst_14 : f32 to vector<8x128xf32>
    %40 = arith.mulf %39, %38 : vector<8x128xf32>
    %41 = tpu.concatenate %24, %40 in 0 : vector<8x128xf32>, vector<8x128xf32> -> vector<16x128xf32>
    %c0_15 = arith.constant 0 : index
    %c0_16 = arith.constant 0 : index
    %c0_17 = arith.constant 0 : index
    %42 = vector.load %arg5[%c0_15, %c0_16, %c0_17] : memref<1x16x128xf32, #tpu.memory_space<vmem>>, vector<1x16x128xf32>
    %43 = vector.shape_cast %42 : vector<1x16x128xf32> to vector<16x128xf32>
    %44 = vector.shape_cast %41 : vector<16x128xf32> to vector<1x16x128xf32>
    tpu.vector_store %arg5[%c0_15, %c0_16, %c0_17], %44 {strides = array<i32>} : memref<1x16x128xf32, #tpu.memory_space<vmem>>, vector<1x16x128xf32>,
    return
  }
  func.func @transform_0(%arg0: i32) -> (i32, i32, i32) {
    %c0_i32 = arith.constant 0 : i32
    %c0_i32_0 = arith.constant 0 : i32
    %c0_i32_1 = arith.constant 0 : i32
    return %arg0, %c0_i32, %c0_i32_0 : i32, i32, i32
  }
  func.func @transform_1(%arg0: i32) -> (i32, i32) {
    %c0_i32 = arith.constant 0 : i32
    %c0_i32_0 = arith.constant 0 : i32
    %c0_i32_1 = arith.constant 0 : i32
    return %c0_i32, %c0_i32_0 : i32, i32
  }
  func.func @transform_2(%arg0: i32) -> (i32, i32) {
    %c0_i32 = arith.constant 0 : i32
    %c0_i32_0 = arith.constant 0 : i32
    %c0_i32_1 = arith.constant 0 : i32
    return %c0_i32, %c0_i32_0 : i32, i32
  }
  func.func @transform_3(%arg0: i32) -> (i32, i32) {
    %c0_i32 = arith.constant 0 : i32
    %c0_i32_0 = arith.constant 0 : i32
    %c0_i32_1 = arith.constant 0 : i32
    return %c0_i32, %c0_i32_0 : i32, i32
  }
  func.func @transform_4(%arg0: i32) -> (i32, i32, i32) {
    %c0_i32 = arith.constant 0 : i32
    %c0_i32_0 = arith.constant 0 : i32
    %c0_i32_1 = arith.constant 0 : i32
    return %arg0, %c0_i32, %c0_i32_0 : i32, i32, i32
  }
}

</mosaic_0001>

<llo_original>
// kernel: tpu_custom_call.1
$region0: #{tpu_custom_call.1}
  #allocation0 [shape = 'u32[]', space=smem, size = 0x4, offset = 0x4, fixed_abs, tag = 'smem constant byte address 0x4 - core index']
  #allocation1 [shape = 'u32[144,128]{1,0:T(1,128)}', space=vmem, size = 0x12000, scoped, tag = 'internal scratch']
  %s0 = inlined_call_operand.vmem [shape: f32[2,16,32], index: 0, kind: input, shape index: {}]
  %s1 = inlined_call_operand.vmem [shape: f32[80,64], index: 1, kind: input, shape index: {}]
  %s2 = inlined_call_operand.vmem [shape: f32[16,40], index: 2, kind: input, shape index: {}]
  %s3 = inlined_call_operand.vmem [shape: f32[8,16], index: 3, kind: input, shape index: {}]
  %s4 = inlined_call_operand.hbm [shape: f32[2,16,128], index: 4, kind: output, shape index: {}]
  %s5 = sld [smem:[#allocation0]]
  $region49: #{tpu_custom_call.1} parent=0
    _
  %s7 = ssub.s32 1, %s5
  %s8 = scalar_select 0, %s7, %s5
  $region1: #{tpu_custom_call.1} parent=0
    #allocation2 [shape = 'u8[16384]{0}', space=vmem, size = 0x4000, scoped, tag = 'output window, operand 0']
    #allocation3 [shape = 's32[2]{0}', space=sflag, size = 0x8, scoped, tag = 'scoped memory for tpu_custom_call.1']
    %9 = vsyncpa [#allocation3], 0
    %s10 = scalar_lea.sflag [#allocation3], 1
    %11 = vsyncpa %s10, 0
    loop: start=0, step=1, limit=4
    $region2: #{tpu_custom_call.1} parent=1 // loop_pre_header
      _
    $region3: #{tpu_custom_call.1} parent=1 // loop_header
      %s13 = sphi 0, %s17
      %p14 = scmp.ge.s32.totalorder %s13, 4
      %s23 = sphi 0, %s25
      %s26 = sphi 0, %s23
      %s27 = sphi 0, %s26
      %s43 = sphi 0, %s27
      %s47 = sphi 0, %s47
      %s49 = sphi 0, %s47
      %s50 = sphi 0, %s49
      %s64 = sphi 0, %s50
      %s68 = sphi 0, %s68
      %s70 = sphi 0, %s68
      %s71 = sphi 0, %s70
      %s85 = sphi 0, %s71
      %s89 = sphi 0, %s89
      %s91 = sphi 0, %s89
      %s92 = sphi 0, %s91
      %s106 = sphi 0, %s92
      %s112 = sphi 0, %s114
      %s115 = sphi 0, %s112
      %s116 = sphi 0, %s115
      %s132 = sphi 0, %s116
    $region4: #{tpu_custom_call.1} parent=1 // loop_header_branch
      %16 = sbr.rel (%p14) target = $region8
    $region5: #{tpu_custom_call.1} parent=1 // loop_body
      %s18 = ssub.s32 %s13, 1
      %s19 = ssub.s32 %s13, 2
      %s20 = sadd.s32 %s13, 1
      %s21 = ssub.s32 %s13, %s20
      %p22 = scmp.eq.s32.totalorder %s21, 0
      %s24 = sadd.s32 %s23, 1
      %s25 = scalar_select %p22, %s23, %s24
      %p28 = pneg %p22
      %p29 = scmp.eq.s32.totalorder %s13, 1
      %p30 = por %p28, %p29
      %p31 = scmp.ne.s32.totalorder %s23, %s26
      %p32 = scmp.eq.s32.totalorder %s13, 0
      %p33 = por %p31, %p32
      %p34 = scmp.ne.s32.totalorder %s23, %s26
      %p35 = scmp.eq.s32.totalorder %s18, 1
      %p36 = por %p34, %p35
      %p37 = scmp.ne.s32.totalorder %s26, %s27
      %p38 = scmp.eq.s32.totalorder %s18, 0
      %p39 = por %p37, %p38
      %p40 = scmp.ne.s32.totalorder %s26, %s27
      %p41 = scmp.eq.s32.totalorder %s19, 1
      %p42 = por %p40, %p41
      %p44 = scmp.ne.s32.totalorder %s27, %s43
      %p45 = scmp.eq.s32.totalorder %s19, 0
      %p46 = por %p44, %p45
      %s48 = sadd.s32 %s47, 1
      %p51 = scmp.eq.s32.totalorder %s13, 1
      %p52 = scmp.ne.s32.totalorder %s47, %s49
      %p53 = scmp.eq.s32.totalorder %s13, 0
      %p54 = por %p52, %p53
      %p55 = scmp.ne.s32.totalorder %s47, %s49
      %p56 = scmp.eq.s32.totalorder %s18, 1
      %p57 = por %p55, %p56
      %p58 = scmp.ne.s32.totalorder %s49, %s50
      %p59 = scmp.eq.s32.totalorder %s18, 0
      %p60 = por %p58, %p59
      %p61 = scmp.ne.s32.totalorder %s49, %s50
      %p62 = scmp.eq.s32.totalorder %s19, 1
      %p63 = por %p61, %p62
      %p65 = scmp.ne.s32.totalorder %s50, %s64
      %p66 = scmp.eq.s32.totalorder %s19, 0
      %p67 = por %p65, %p66
      %s69 = sadd.s32 %s68, 1
      %p72 = scmp.eq.s32.totalorder %s13, 1
      %p73 = scmp.ne.s32.totalorder %s68, %s70
      %p74 = scmp.eq.s32.totalorder %s13, 0
      %p75 = por %p73, %p74
      %p76 = scmp.ne.s32.totalorder %s68, %s70
      %p77 = scmp.eq.s32.totalorder %s18, 1
      %p78 = por %p76, %p77
      %p79 = scmp.ne.s32.totalorder %s70, %s71
      %p80 = scmp.eq.s32.totalorder %s18, 0
      %p81 = por %p79, %p80
      %p82 = scmp.ne.s32.totalorder %s70, %s71
      %p83 = scmp.eq.s32.totalorder %s19, 1
      %p84 = por %p82, %p83
      %p86 = scmp.ne.s32.totalorder %s71, %s85
      %p87 = scmp.eq.s32.totalorder %s19, 0
      %p88 = por %p86, %p87
      %s90 = sadd.s32 %s89, 1
      %p93 = scmp.eq.s32.totalorder %s13, 1
      %p94 = scmp.ne.s32.totalorder %s89, %s91
      %p95 = scmp.eq.s32.totalorder %s13, 0
      %p96 = por %p94, %p95
      %p97 = scmp.ne.s32.totalorder %s89, %s91
      %p98 = scmp.eq.s32.totalorder %s18, 1
      %p99 = por %p97, %p98
      %p100 = scmp.ne.s32.totalorder %s91, %s92
      %p101 = scmp.eq.s32.totalorder %s18, 0
      %p102 = por %p100, %p101
      %p103 = scmp.ne.s32.totalorder %s91, %s92
      %p104 = scmp.eq.s32.totalorder %s19, 1
      %p105 = por %p103, %p104
      %p107 = scmp.ne.s32.totalorder %s92, %s106
      %p108 = scmp.eq.s32.totalorder %s19, 0
      %p109 = por %p107, %p108
      %s110 = ssub.s32 %s13, %s20
      %p111 = scmp.eq.s32.totalorder %s110, 0
      %s113 = sadd.s32 %s112, 1
      %s114 = scalar_select %p111, %s112, %s113
      %p117 = pneg %p111
      %p118 = scmp.eq.s32.totalorder %s13, 1
      %p119 = por %p117, %p118
      %p120 = scmp.ne.s32.totalorder %s112, %s115
      %p121 = scmp.eq.s32.totalorder %s13, 0
      %p122 = por %p120, %p121
      %p123 = scmp.ne.s32.totalorder %s112, %s115
      %p124 = scmp.eq.s32.totalorder %s18, 1
      %p125 = por %p123, %p124
      %p126 = scmp.ne.s32.totalorder %s115, %s116
      %p127 = scmp.eq.s32.totalorder %s18, 0
      %p128 = por %p126, %p127
      %p129 = scmp.ne.s32.totalorder %s115, %s116
      %p130 = scmp.eq.s32.totalorder %s19, 1
      %p131 = por %p129, %p130
      %p133 = scmp.ne.s32.totalorder %s116, %s132
      %p134 = scmp.eq.s32.totalorder %s19, 0
      %p135 = por %p133, %p134
      %p136 = scmp.le.s32.totalorder 1, %s13
      %p137 = scmp.lt.s32.totalorder %s13, 3
      %p138 = pnand %p136, %p137
      %p139 = pneg %p138
      // Predicated region
      $region9: #{tpu_custom_call.1} parent=5 // pred_check
        _
      $region10: #{tpu_custom_call.1} parent=5 // pred_check_branch
        %141 = sbr.rel (%p138) target = $region12
      $region11: #{tpu_custom_call.1} parent=5 // pred_region
        %s142 = ssub.s32 %s13, 1
        // Predicated region
        $region13: #{tpu_custom_call.1} parent=11 // pred_check
          %p143 = pneg %p60
        $region14: #{tpu_custom_call.1} parent=11 // pred_check_branch
          %145 = sbr.rel (%p143) target = $region16
        $region15: #{tpu_custom_call.1} parent=11 // pred_region
          _
        $region16: #{tpu_custom_call.1} parent=11 // pred_fallthru
          _
        // Predicated region
        $region17: #{tpu_custom_call.1} parent=11 // pred_check
          %p146 = pneg %p81
        $region18: #{tpu_custom_call.1} parent=11 // pred_check_branch
          %148 = sbr.rel (%p146) target = $region20
        $region19: #{tpu_custom_call.1} parent=11 // pred_region
          _
        $region20: #{tpu_custom_call.1} parent=11 // pred_fallthru
          _
        // Predicated region
        $region21: #{tpu_custom_call.1} parent=11 // pred_check
          %p149 = pneg %p102
        $region22: #{tpu_custom_call.1} parent=11 // pred_check_branch
          %151 = sbr.rel (%p149) target = $region24
        $region23: #{tpu_custom_call.1} parent=11 // pred_region
          _
        $region24: #{tpu_custom_call.1} parent=11 // pred_fallthru
          _
      $region12: #{tpu_custom_call.1} parent=5 // pred_fallthru
        _
      %p152 = scmp.lt.s32.totalorder %s13, 2
      // Predicated region
      $region25: #{tpu_custom_call.1} parent=5 // pred_check
        %p153 = pneg %p152
      $region26: #{tpu_custom_call.1} parent=5 // pred_check_branch
        %155 = sbr.rel (%p153) target = $region28
      $region27: #{tpu_custom_call.1} parent=5 // pred_region
        // Predicated region
        $region29: #{tpu_custom_call.1} parent=27 // pred_check
          %p156 = pneg %p33
        $region30: #{tpu_custom_call.1} parent=27 // pred_check_branch
          %158 = sbr.rel (%p156) target = $region32
        $region31: #{tpu_custom_call.1} parent=27 // pred_region
          %p159 = scmp.lt.s32.totalorder %s13, 1
          %s160 = scalar_select %p159, %s13, 1
          %s161 = smul.addr %s160, 2
          %s162 = smul.addr %s161, 8
          %s163 = scalar_lea.vmem %s0, %s162
        $region32: #{tpu_custom_call.1} parent=27 // pred_fallthru
          _
      $region28: #{tpu_custom_call.1} parent=5 // pred_fallthru
        _
      %p164 = scmp.le.s32.totalorder 1, %s13
      %p165 = scmp.lt.s32.totalorder %s13, 3
      %p166 = pnand %p164, %p165
      %p167 = pneg %p166
      // Predicated region
      $region33: #{tpu_custom_call.1} parent=5 // pred_check
        _
      $region34: #{tpu_custom_call.1} parent=5 // pred_check_branch
        %169 = sbr.rel (%p166) target = $region36
      $region35: #{tpu_custom_call.1} parent=5 // pred_region
        %s170 = ssub.s32 %s13, 1
        %p171 = scmp.lt.s32.totalorder %s18, 1
        %s172 = scalar_select %p171, %s18, 1
        %s173 = smul.addr %s172, 2
        %s174 = smul.addr %s173, 8
        %s175 = scalar_lea.vmem %s0, %s174
        %p176 = pneg %p39
        %p177 = pneg %p36
        %p178 = pneg %p60
        %p179 = pneg %p57
        %p180 = pneg %p81
        %p181 = pneg %p78
        %p182 = pneg %p102
        %p183 = pneg %p99
        %p184 = pneg %p128
        %p185 = pneg %p125
        %s186 = sand.u32 %s115, 1
        %s187 = scalar_lea.sflag [#allocation3], %s186
        %s188 = sand.u32 %s115, 1
        %s189 = smul.addr %s188, 16
        %s190 = scalar_lea.vmem [#allocation2], %s189
        %p191 = scmp.lt.s32.totalorder %s18, 1
        %s192 = scalar_select %p191, %s18, 1
        %s193 = smul.addr %s192, 2
        %s194 = smul.addr %s193, 8
        %s195 = scalar_lea.vmem %s0, %s194
        %v196 = vld [vmem:[%s1] sm:$0xff]
        %v197 = vld [vmem:[%s1 + $0x8] sm:$0xff]
        %v198 = vld [vmem:[%s1 + $0x10] sm:$0xff]
        %v199 = vld [vmem:[%s1 + $0x18] sm:$0xff]
        %v200 = vld [vmem:[%s1 + $0x20] sm:$0xff]
        %v201 = vld [vmem:[%s1 + $0x28] sm:$0xff]
        %v202 = vld [vmem:[%s1 + $0x30] sm:$0xff]
        %v203 = vld [vmem:[%s1 + $0x38] sm:$0xff]
        %v204 = vld [vmem:[%s1 + $0x40] sm:$0xff]
        %v205 = vld [vmem:[%s1 + $0x48] sm:$0xff]
        %v206 = vld [vmem:[%s2] sm:$0xff]
        %v207 = vld [vmem:[%s2 + $0x8] sm:$0xff]
        %v208 = vld [vmem:[%s3] sm:$0xff]
        %v209 = vld [vmem:[%s195] sm:$0xff]
        %v210 = vld [vmem:[%s195 + $0x8] sm:$0xff]
        %vm213 = vcmask 1046528
        %v214 = vrot.slane %v209, 1
        %v215 = vrot.slane %v210, 1
        %v216 = vsel %vm213, %v214, %v215
        %217 = vrot.lane.b32.xlu0 %v216, 32
        %v218 = vpop.permute.xlu0 %217
        %219 = vrot.lane.b32.xlu0 %v215, 32
        %v220 = vpop.permute.xlu0 %219
        %vm223 = vcmask 261120
        %v224 = vsel %vm223, %v209, %v218
        %v225 = vsel %vm223, %v210, %v220
        %vm226 = vcmask 1040384
        %v227 = vsel %vm226, %v225, 0.0
        %vm228 = vcmask 523264
        %v230 = vsel %vm228, %v196, 0
        %v233 = vsel %vm228, %v197, 0
        %v236 = vsel %vm228, %v198, 0
        %v239 = vsel %vm228, %v199, 0
        %v242 = vsel %vm228, %v200, 0
        %v245 = vsel %vm228, %v201, 0
        %v248 = vsel %vm228, %v202, 0
        %v251 = vsel %vm228, %v203, 0
        %v254 = vsel %vm228, %v204, 0
        %v257 = vsel %vm228, %v205, 0
        %v260 = vsel %vm228, %v224, 0
        %v263 = vsel %vm228, %v227, 0
        %v266 = vsel %vm228, 0.0, 0
        %268 = vmatprep.subr.mxu0 0.0
        %269 = vmatpush1.xpose.msra.mxu0 %v260
        %270 = vmatprep.subr.mxu0 0.0
        %271 = vmatpush1.xpose.msra.mxu0 %v263
        %272 = vmatprep.subr.mxu0 0.0
        %273 = vmatpush1.xpose.msra.mxu0 %v266
        %274 = vmatprep.subr.mxu0 0.0
        %275 = vmatpush1.xpose.msra.mxu0 %v266
        %276 = vmatprep.subr.mxu0 0.0
        %277 = vmatpush1.xpose.msra.mxu0 %v266
        %278 = vmatprep.subr.mxu0 0.0
        %279 = vmatpush1.xpose.msra.mxu0 %v266
        %280 = vmatprep.subr.mxu0 0.0
        %281 = vmatpush1.xpose.msra.mxu0 %v266
        %282 = vmatprep.subr.mxu0 0.0
        %283 = vmatpush1.xpose.msra.mxu0 %v266
        %284 = vmatprep.subr.mxu0 0.0
        %285 = vmatpush1.xpose.msra.mxu0 %v266
        %286 = vmatprep.subr.mxu0 0.0
        %287 = vmatpush1.xpose.msra.mxu0 %v266
        %288 = vmatprep.subr.mxu0 0.0
        %289 = vmatpush1.xpose.msra.mxu0 %v266
        %290 = vmatprep.subr.mxu0 0.0
        %291 = vmatpush1.xpose.msra.mxu0 %v266
        %292 = vmatprep.subr.mxu0 0.0
        %293 = vmatpush1.xpose.msra.mxu0 %v266
        %294 = vmatprep.subr.mxu0 0.0
        %295 = vmatpush1.xpose.msra.mxu0 %v266
        %296 = vmatprep.subr.mxu0 0.0
        %297 = vmatpush1.xpose.msra.mxu0 %v266
        %298 = vmatprep.subr.mxu0 0.0
        %299 = vmatpush1.xpose.msra.mxu0 %v266
        %300 = vmatprep.subr.mxu0 0.0
        %301 = vmatpush1.xpose.msra.mxu0 0.0
        %302 = vmatprep.subr.mxu0 0.0
        %303 = vmatpush1.xpose.msra.mxu0 0.0
        %304 = vmatprep.subr.mxu0 0.0
        %305 = vmatpush1.xpose.msra.mxu0 0.0
        %306 = vmatprep.subr.mxu0 0.0
        %307 = vmatpush1.xpose.msra.mxu0 0.0
        %308 = vmatprep.subr.mxu0 0.0
        %309 = vmatpush1.xpose.msra.mxu0 0.0
        %310 = vmatprep.subr.mxu0 0.0
        %311 = vmatpush1.xpose.msra.mxu0 0.0
        %312 = vmatprep.subr.mxu0 0.0
        %313 = vmatpush1.xpose.msra.mxu0 0.0
        %314 = vmatprep.subr.mxu0 0.0
        %315 = vmatpush1.xpose.msra.mxu0 0.0
        %316 = vmatprep.subr.mxu0 0.0
        %317 = vmatpush1.xpose.msra.mxu0 0.0
        %318 = vmatprep.subr.mxu0 0.0
        %319 = vmatpush1.xpose.msra.mxu0 0.0
        %320 = vmatprep.subr.mxu0 0.0
        %321 = vmatpush1.xpose.msra.mxu0 0.0
        %322 = vmatprep.subr.mxu0 0.0
        %323 = vmatpush1.xpose.msra.mxu0 0.0
        %324 = vmatprep.subr.mxu0 0.0
        %325 = vmatpush1.xpose.msra.mxu0 0.0
        %326 = vmatprep.subr.mxu0 0.0
        %327 = vmatpush1.xpose.msra.mxu0 0.0
        %328 = vmatprep.subr.mxu0 0.0
        %329 = vmatpush1.xpose.msra.mxu0 0.0
        %330 = vmatprep.subr.mxu0 0.0
        %331 = vmatpush1.xpose.msra.mxu0 0.0
        %332 = vmatprep.mubr.f32.mxu0 0.0
        %333 = vmatmul.mubr.f32.gmra.mrb[0].mxu0 %v230
        %v334 = vpop.f32.mrb[0].mxu0
        %v335 = vadd.f32 0.0, %v334
        %v336 = vpop.f32.mrb[0].mxu0
        %337 = vmatprep.mubr.f32.mxu0 0.0
        %338 = vmatmul.mubr.f32.gmra.mrb[0].mxu0 %v233
        %v339 = vpop.f32.mrb[0].mxu0
        %v340 = vadd.f32 0.0, %v339
        %v341 = vpop.f32.mrb[0].mxu0
        %342 = vmatprep.mubr.f32.mxu0 0.0
        %343 = vmatmul.mubr.f32.gmra.mrb[0].mxu0 %v236
        %v344 = vpop.f32.mrb[0].mxu0
        %v345 = vadd.f32 0.0, %v344
        %v346 = vpop.f32.mrb[0].mxu0
        %347 = vmatprep.mubr.f32.mxu0 0.0
        %348 = vmatmul.mubr.f32.gmra.mrb[0].mxu0 %v239
        %v349 = vpop.f32.mrb[0].mxu0
        %v350 = vadd.f32 0.0, %v349
        %v351 = vpop.f32.mrb[0].mxu0
        %352 = vmatprep.mubr.f32.mxu0 0.0
        %353 = vmatmul.mubr.f32.gmra.mrb[0].mxu0 %v242
        %v354 = vpop.f32.mrb[0].mxu0
        %v355 = vadd.f32 0.0, %v354
        %v356 = vpop.f32.mrb[0].mxu0
        %357 = vmatprep.mubr.f32.mxu0 0.0
        %358 = vmatmul.mubr.f32.gmra.mrb[0].mxu0 %v245
        %v359 = vpop.f32.mrb[0].mxu0
        %v360 = vadd.f32 0.0, %v359
        %v361 = vpop.f32.mrb[0].mxu0
        %362 = vmatprep.mubr.f32.mxu0 0.0
        %363 = vmatmul.mubr.f32.gmra.mrb[0].mxu0 %v248
        %v364 = vpop.f32.mrb[0].mxu0
        %v365 = vadd.f32 0.0, %v364
        %v366 = vpop.f32.mrb[0].mxu0
        %367 = vmatprep.mubr.f32.mxu0 0.0
        %368 = vmatmul.mubr.f32.gmra.mrb[0].mxu0 %v251
        %v369 = vpop.f32.mrb[0].mxu0
        %v370 = vadd.f32 0.0, %v369
        %v371 = vpop.f32.mrb[0].mxu0
        %372 = vmatprep.mubr.f32.mxu0 0.0
        %373 = vmatmul.mubr.f32.gmra.mrb[0].mxu0 %v254
        %v374 = vpop.f32.mrb[0].mxu0
        %v375 = vadd.f32 0.0, %v374
        %v376 = vpop.f32.mrb[0].mxu0
        %377 = vmatprep.mubr.f32.mxu0 0.0
        %378 = vmatmul.mubr.f32.gmra.mrb[0].mxu0 %v257
        %v379 = vpop.f32.mrb[0].mxu0
        %v380 = vadd.f32 0.0, %v379
        %v381 = vpop.f32.mrb[0].mxu0
        %382 = vdwg.mxu0
        %v383 = vmul.f32 %v335, %v335
        %v384 = vmul.f32 %v340, %v340
        %v385 = vmul.f32 %v345, %v345
        %v386 = vmul.f32 %v350, %v350
        %v387 = vmul.f32 %v355, %v355
        %v388 = vmul.f32 %v360, %v360
        %v389 = vmul.f32 %v365, %v365
        %v390 = vmul.f32 %v370, %v370
        %v391 = vmul.f32 %v375, %v375
        %v392 = vmul.f32 %v380, %v380
        %v393 = vadd.f32 %v383, %v388
        %v394 = vadd.f32 %v384, %v389
        %v395 = vadd.f32 %v385, %v390
        %v396 = vadd.f32 %v386, %v391
        %v397 = vadd.f32 %v387, %v392
        %vm398 = vcmask 326656
        %v400 = vsel %vm398, %v206, 0
        %v403 = vsel %vm398, %v207, 0
        %405 = vmatprep.subr.mxu0 0.0
        %406 = vmatpush1.msra.mxu0 %v393
        %407 = vmatprep.subr.mxu0 0.0
        %408 = vmatpush1.msra.mxu0 %v394
        %409 = vmatprep.subr.mxu0 0.0
        %410 = vmatpush1.msra.mxu0 %v395
        %411 = vmatprep.subr.mxu0 0.0
        %412 = vmatpush1.msra.mxu0 %v396
        %413 = vmatprep.subr.mxu0 0.0
        %414 = vmatpush1.msra.mxu0 %v397
        %415 = vmatprep.subr.mxu0 0.0
        %416 = vmatpush1.msra.mxu0 0.0
        %417 = vmatprep.subr.mxu0 0.0
        %418 = vmatpush1.msra.mxu0 0.0
        %419 = vmatprep.subr.mxu0 0.0
        %420 = vmatpush1.msra.mxu0 0.0
        %421 = vmatprep.subr.mxu0 0.0
        %422 = vmatpush1.msra.mxu0 0.0
        %423 = vmatprep.subr.mxu0 0.0
        %424 = vmatpush1.msra.mxu0 0.0
        %425 = vmatprep.subr.mxu0 0.0
        %426 = vmatpush1.msra.mxu0 0.0
        %427 = vmatprep.subr.mxu0 0.0
        %428 = vmatpush1.msra.mxu0 0.0
        %429 = vmatprep.subr.mxu0 0.0
        %430 = vmatpush1.msra.mxu0 0.0
        %431 = vmatprep.subr.mxu0 0.0
        %432 = vmatpush1.msra.mxu0 0.0
        %433 = vmatprep.subr.mxu0 0.0
        %434 = vmatpush1.msra.mxu0 0.0
        %435 = vmatprep.subr.mxu0 0.0
        %436 = vmatpush1.msra.mxu0 0.0
        %437 = vmatprep.subr.mxu0 0.0
        %438 = vmatpush1.msra.mxu0 0.0
        %439 = vmatprep.subr.mxu0 0.0
        %440 = vmatpush1.msra.mxu0 0.0
        %441 = vmatprep.subr.mxu0 0.0
        %442 = vmatpush1.msra.mxu0 0.0
        %443 = vmatprep.subr.mxu0 0.0
        %444 = vmatpush1.msra.mxu0 0.0
        %445 = vmatprep.subr.mxu0 0.0
        %446 = vmatpush1.msra.mxu0 0.0
        %447 = vmatprep.subr.mxu0 0.0
        %448 = vmatpush1.msra.mxu0 0.0
        %449 = vmatprep.subr.mxu0 0.0
        %450 = vmatpush1.msra.mxu0 0.0
        %451 = vmatprep.subr.mxu0 0.0
        %452 = vmatpush1.msra.mxu0 0.0
        %453 = vmatprep.subr.mxu0 0.0
        %454 = vmatpush1.msra.mxu0 0.0
        %455 = vmatprep.subr.mxu0 0.0
        %456 = vmatpush1.msra.mxu0 0.0
        %457 = vmatprep.subr.mxu0 0.0
        %458 = vmatpush1.msra.mxu0 0.0
        %459 = vmatprep.subr.mxu0 0.0
        %460 = vmatpush1.msra.mxu0 0.0
        %461 = vmatprep.subr.mxu0 0.0
        %462 = vmatpush1.msra.mxu0 0.0
        %463 = vmatprep.subr.mxu0 0.0
        %464 = vmatpush1.msra.mxu0 0.0
        %465 = vmatprep.subr.mxu0 0.0
        %466 = vmatpush1.msra.mxu0 0.0
        %467 = vmatprep.subr.mxu0 0.0
        %468 = vmatpush1.msra.mxu0 0.0
        %469 = vmatprep.mubr.f32.mxu0 0.0
        %470 = vmatmul.mubr.f32.gmra.mrb[0].mxu0 %v400
        %v471 = vpop.f32.mrb[0].mxu0
        %v472 = vadd.f32 0.0, %v471
        %v473 = vpop.f32.mrb[0].mxu0
        %474 = vmatprep.mubr.f32.mxu0 0.0
        %475 = vmatmul.mubr.f32.gmra.mrb[0].mxu0 %v403
        %v476 = vpop.f32.mrb[0].mxu0
        %v477 = vadd.f32 0.0, %v476
        %v478 = vpop.f32.mrb[0].mxu0
        %479 = vdwg.mxu0
        %v480 = vmax.f32 %v472, 1e-10
        %v481 = vmax.f32 %v477, 1e-10
        %v482 = vlog2.pop %v480
        %v483 = vmul.f32 %v482, 0.6931472
        %v484 = vlog2.pop %v481
        %v485 = vmul.f32 %v484, 0.6931472
        %v486 = vmul.f32 %v483, 0.4342945
        %v487 = vmul.f32 %v485, 0.4342945
        %v488 = vmul.f32 %v486, 10.0
        %v489 = vmul.f32 %v487, 10.0
        %vm490 = vcmask 130048
        %v492 = vsel %vm490, %v208, 0
        %494 = vmatprep.subr.mxu0 0.0
        %495 = vmatpush1.msra.mxu0 %v488
        %496 = vmatprep.subr.mxu0 0.0
        %497 = vmatpush1.msra.mxu0 %v489
        %498 = vmatprep.subr.mxu0 0.0
        %499 = vmatpush1.msra.mxu0 0.0
        %500 = vmatprep.subr.mxu0 0.0
        %501 = vmatpush1.msra.mxu0 0.0
        %502 = vmatprep.subr.mxu0 0.0
        %503 = vmatpush1.msra.mxu0 0.0
        %504 = vmatprep.subr.mxu0 0.0
        %505 = vmatpush1.msra.mxu0 0.0
        %506 = vmatprep.subr.mxu0 0.0
        %507 = vmatpush1.msra.mxu0 0.0
        %508 = vmatprep.subr.mxu0 0.0
        %509 = vmatpush1.msra.mxu0 0.0
        %510 = vmatprep.subr.mxu0 0.0
        %511 = vmatpush1.msra.mxu0 0.0
        %512 = vmatprep.subr.mxu0 0.0
        %513 = vmatpush1.msra.mxu0 0.0
        %514 = vmatprep.subr.mxu0 0.0
        %515 = vmatpush1.msra.mxu0 0.0
        %516 = vmatprep.subr.mxu0 0.0
        %517 = vmatpush1.msra.mxu0 0.0
        %518 = vmatprep.subr.mxu0 0.0
        %519 = vmatpush1.msra.mxu0 0.0
        %520 = vmatprep.subr.mxu0 0.0
        %521 = vmatpush1.msra.mxu0 0.0
        %522 = vmatprep.subr.mxu0 0.0
        %523 = vmatpush1.msra.mxu0 0.0
        %524 = vmatprep.subr.mxu0 0.0
        %525 = vmatpush1.msra.mxu0 0.0
        %526 = vmatprep.subr.mxu0 0.0
        %527 = vmatpush1.msra.mxu0 0.0
        %528 = vmatprep.subr.mxu0 0.0
        %529 = vmatpush1.msra.mxu0 0.0
        %530 = vmatprep.subr.mxu0 0.0
        %531 = vmatpush1.msra.mxu0 0.0
        %532 = vmatprep.subr.mxu0 0.0
        %533 = vmatpush1.msra.mxu0 0.0
        %534 = vmatprep.subr.mxu0 0.0
        %535 = vmatpush1.msra.mxu0 0.0
        %536 = vmatprep.subr.mxu0 0.0
        %537 = vmatpush1.msra.mxu0 0.0
        %538 = vmatprep.subr.mxu0 0.0
        %539 = vmatpush1.msra.mxu0 0.0
        %540 = vmatprep.subr.mxu0 0.0
        %541 = vmatpush1.msra.mxu0 0.0
        %542 = vmatprep.subr.mxu0 0.0
        %543 = vmatpush1.msra.mxu0 0.0
        %544 = vmatprep.subr.mxu0 0.0
        %545 = vmatpush1.msra.mxu0 0.0
        %546 = vmatprep.subr.mxu0 0.0
        %547 = vmatpush1.msra.mxu0 0.0
        %548 = vmatprep.subr.mxu0 0.0
        %549 = vmatpush1.msra.mxu0 0.0
        %550 = vmatprep.subr.mxu0 0.0
        %551 = vmatpush1.msra.mxu0 0.0
        %552 = vmatprep.subr.mxu0 0.0
        %553 = vmatpush1.msra.mxu0 0.0
        %554 = vmatprep.subr.mxu0 0.0
        %555 = vmatpush1.msra.mxu0 0.0
        %556 = vmatprep.subr.mxu0 0.0
        %557 = vmatpush1.msra.mxu0 0.0
        %558 = vmatprep.mubr.f32.mxu0 0.0
        %559 = vmatmul.mubr.f32.gmra.mrb[0].mxu0 %v492
        %v560 = vpop.f32.mrb[0].mxu0
        %v561 = vadd.f32 0.0, %v560
        %v562 = vpop.f32.mrb[0].mxu0
        %563 = vdwg.mxu0
        %v564 = vlaneseq
        %v565 = vand.u32 %v564, 127
        %567 = vrot.lane.b32.xlu0 %v561, 1
        %v568 = vpop.permute.xlu0 %567
        %570 = vrot.lane.b32.xlu0 %v561, 127
        %v571 = vpop.permute.xlu0 %570
        %vm573 = vcmp.eq.s32.totalorder %v565, 0
        %v574 = vsel %vm573, %v561, %v568
        %vm575 = vcmp.ge.s32.totalorder %v565, 8
        %v576 = vsel %vm575, %v561, %v571
        %v577 = vsub.f32 %v576, %v574
        %v578 = vmul.f32 %v577, 0.5
        %579 = vst [vmem:[%s190] sm:$0xff] %v561
        %580 = vst [vmem:[%s190 + $0x8] sm:$0xff] %v578
        %s581 = sand.u32 %s115, 1
        %s582 = scalar_lea.sflag [#allocation3], %s581
        %s583 = sand.u32 %s115, 1
        %s584 = smul.addr %s583, 16
        %s585 = scalar_lea.vmem [#allocation2], %s584
        // Predicated region
        $region37: #{tpu_custom_call.1} parent=35 // pred_check
          %p586 = pneg %p125
        $region38: #{tpu_custom_call.1} parent=35 // pred_check_branch
          %588 = sbr.rel (%p586) target = $region40
        $region39: #{tpu_custom_call.1} parent=35 // pred_region
          %s590 = ssub.s32 256, 256
          %591 = vsyncadd %s582, %s590
          %s592 = smul.addr %s18, 2
          %s593 = smul.addr %s592, 128
          %s594 = scalar_lea.hbm %s4, %s593
          %s595 = sshll.u32 %s585, 4
          %s596 = int_to_ptr.vmem [resolvable:$true] %s595
          %601 = dma.vmem_to_hbm [thread:$0]  %s596, 256, %s594, %s582, 128, 128, 8
        $region40: #{tpu_custom_call.1} parent=35 // pred_fallthru
          _
      $region36: #{tpu_custom_call.1} parent=5 // pred_fallthru
        _
      %p602 = scmp.le.s32.totalorder 2, %s13
      // Predicated region
      $region41: #{tpu_custom_call.1} parent=5 // pred_check
        %p603 = pneg %p602
      $region42: #{tpu_custom_call.1} parent=5 // pred_check_branch
        %605 = sbr.rel (%p603) target = $region44
      $region43: #{tpu_custom_call.1} parent=5 // pred_region
        %s606 = ssub.s32 %s13, 2
        // Predicated region
        $region45: #{tpu_custom_call.1} parent=43 // pred_check
          %p607 = pneg %p131
        $region46: #{tpu_custom_call.1} parent=43 // pred_check_branch
          %609 = sbr.rel (%p607) target = $region48
        $region47: #{tpu_custom_call.1} parent=43 // pred_region
          %s610 = sand.u32 %s116, 1
          %s611 = scalar_lea.sflag [#allocation3], %s610
          %s612 = sand.u32 %s116, 1
          %s613 = smul.addr %s612, 16
          %s614 = scalar_lea.vmem [#allocation2], %s613
          %615 = dma.done %s611, 256
        $region48: #{tpu_custom_call.1} parent=43 // pred_fallthru
          _
      $region44: #{tpu_custom_call.1} parent=5 // pred_fallthru
        _
    $region6: #{tpu_custom_call.1} parent=1 // loop_footer
      %s17 = sadd.s32 1, %s13
    $region7: #{tpu_custom_call.1} parent=1 // loop_footer_branch
      %12 = sbr.rel target = $region3
    $region8: #{tpu_custom_call.1} parent=1 // loop_exit
      _
    %616 = vsyncpa [#allocation3], 1
    %s617 = scalar_lea.sflag [#allocation3], 1
    %618 = vsyncpa %s617, 1

</llo_original>
